<compile_context>
chip_gen: v7x
topology: tpu7x:2x2x1
jax: 0.10.0
libtpu: 0.0.40
codegen_flags: <defaults>
</compile_context>

<pallas_src>
import functools

import numpy as np
import jax
import jax.numpy as jnp
from jax.experimental import pallas as pl
from jax.experimental.pallas import tpu as pltpu


def _round_up(x, m):
    return ((x + m - 1) // m) * m


# ----------------------------------------------------------------------------
# Pallas kernels
# ----------------------------------------------------------------------------
def _pair_cost_kernel(det_ref, boxt_ref, cost_ref, *, cost_bbox_w, cost_giou_w):
    """One (target, detection-tile) grid step.

    det_ref : (1, TILE_ND, 4)    detections, cxcywh, rows on sublanes
    boxt_ref: (1, 4, NT_PAD)     target boxes, cxcywh, targets on lanes
    cost_ref: (1, TILE_ND, NT_PAD)
      cost[i,j] = cost_bbox * ||det_i - box_j||_1 - cost_giou * GIoU(det_i, box_j)
    """
    det = det_ref[0]        # (TILE_ND, 4)
    boxt = boxt_ref[0]      # (4, NT_PAD)

    cx_d = det[:, 0:1]
    cy_d = det[:, 1:2]
    w_d = det[:, 2:3]
    h_d = det[:, 3:4]
    cx_t = boxt[0:1, :]
    cy_t = boxt[1:2, :]
    w_t = boxt[2:3, :]
    h_t = boxt[3:4, :]

    # L1 distance on raw cxcywh coordinates (torch.cdist(..., p=1))
    l1 = (jnp.abs(cx_d - cx_t) + jnp.abs(cy_d - cy_t)
          + jnp.abs(w_d - w_t) + jnp.abs(h_d - h_t))

    # box_cxcywh_to_xyxy
    x0_d = cx_d - 0.5 * w_d
    x1_d = cx_d + 0.5 * w_d
    y0_d = cy_d - 0.5 * h_d
    y1_d = cy_d + 0.5 * h_d
    x0_t = cx_t - 0.5 * w_t
    x1_t = cx_t + 0.5 * w_t
    y0_t = cy_t - 0.5 * h_t
    y1_t = cy_t + 0.5 * h_t

    area_d = w_d * h_d
    area_t = w_t * h_t

    # intersection / union
    lt_x = jnp.maximum(x0_d, x0_t)
    lt_y = jnp.maximum(y0_d, y0_t)
    rb_x = jnp.minimum(x1_d, x1_t)
    rb_y = jnp.minimum(y1_d, y1_t)
    inter = jnp.maximum(rb_x - lt_x, 0.0) * jnp.maximum(rb_y - lt_y, 0.0)
    union = area_d + area_t - inter
    # Divides -> EUP approx reciprocal (frees the saturating VALU slot).
    # Like the torch reference, degenerate (zero-area) boxes are not supported.
    iou = inter * pl.reciprocal(union, approx=True)

    # smallest enclosing box (max - min is already >= 0, no clamp needed)
    enc_x = jnp.maximum(x1_d, x1_t) - jnp.minimum(x0_d, x0_t)
    enc_y = jnp.maximum(y1_d, y1_t) - jnp.minimum(y0_d, y0_t)
    enc_area = enc_x * enc_y
    giou = iou - (enc_area - union) * pl.reciprocal(enc_area, approx=True)

    cost_ref[0] = cost_bbox_w * l1 - cost_giou_w * giou


def _prob_kernel(logits_ref, prob_ref, *, focal):
    x = logits_ref[...]
    if focal:
        prob_ref[...] = jax.nn.sigmoid(x)
    else:
        m = jnp.max(x, axis=-1, keepdims=True)
        e = jnp.exp(x - m)
        prob_ref[...] = e / jnp.sum(e, axis=-1, keepdims=True)


# ----------------------------------------------------------------------------
# Kernel wrappers
# ----------------------------------------------------------------------------
def pallas_pair_cost_batched(det_list, box_list, cost_bbox_w, cost_giou_w):
    """All targets in ONE pallas_call.

    det_list[i]: [Nd_i, 4] cxcywh detections, box_list[i]: [Nt_i, 4] cxcywh boxes.
    Returns a device array [T, Nd_pad, Nt_pad]; valid region is sliced on host.
    """
    T = len(det_list)
    max_nd = max(int(np.asarray(d).shape[0]) for d in det_list)
    max_nt = max(int(np.asarray(b).shape[0]) for b in box_list)

    nt_pad = _round_up(max(max_nt, 1), 128)       # lane-dense output stores
    nd_pad8 = _round_up(max(max_nd, 1), 8)

    # Detection-axis tile: keep the double-buffered output tile well under the
    # 32 MiB scoped-VMEM default (v7x only has 64 MiB physical VMEM).
    cap = max(8, min(256, ((4 * 1024 * 1024) // (nt_pad * 4)) // 8 * 8))
    tile_nd = nd_pad8 if nd_pad8 <= cap else cap
    nd_pad = _round_up(nd_pad8, tile_nd)

    # Pad with a valid dummy box so padded rows/cols stay finite (no 0-area).
    fill = np.array([0.5, 0.5, 1.0, 1.0], np.float32)
    det_stack = np.tile(fill, (T, nd_pad, 1)).astype(np.float32)        # [T, Nd_pad, 4]
    boxt_stack = np.tile(fill.reshape(1, 4, 1), (T, 1, nt_pad)).astype(np.float32)  # [T,4,Nt_pad]
    for i, (d, b) in enumerate(zip(det_list, box_list)):
        d = np.asarray(d, np.float32)
        b = np.asarray(b, np.float32)
        det_stack[i, :d.shape[0], :] = d
        boxt_stack[i, :, :b.shape[0]] = b.T     # transpose folded into the padding pass

    kern = functools.partial(_pair_cost_kernel,
                             cost_bbox_w=float(cost_bbox_w),
                             cost_giou_w=float(cost_giou_w))
    return pl.pallas_call(
        kern,
        out_shape=jax.ShapeDtypeStruct((T, nd_pad, nt_pad), jnp.float32),
        grid=(T, nd_pad // tile_nd),
        in_specs=[
            pl.BlockSpec((1, tile_nd, 4), lambda t, i: (t, i, 0)),
            pl.BlockSpec((1, 4, nt_pad), lambda t, i: (t, 0, 0)),
        ],
        out_specs=pl.BlockSpec((1, tile_nd, nt_pad), lambda t, i: (t, i, 0)),
        compiler_params=pltpu.CompilerParams(
            dimension_semantics=("parallel", "parallel")),  # megacore-friendly on v7x
    )(jnp.asarray(det_stack), jnp.asarray(boxt_stack))


def pallas_out_prob(pred_logits, focal):
    """pred_logits: [B,Q,C] -> flatten(0,1), softmax(-1) (or sigmoid), as [B*Q, C]."""
    b, q, c = pred_logits.shape
    rows = b * q
    flat = np.asarray(pred_logits, np.float32).reshape(rows, c)

    c_pad = _round_up(c, 128)                 # lane-dense, avoids masked stores
    tile_r = 128 if rows > 128 else _round_up(rows, 8)
    rows_pad = _round_up(rows, tile_r)

    # Pad logits with a very negative value -> exp() underflows to 0, so the
    # softmax over the padded lane dim equals the softmax over the real C lanes.
    buf = np.full((rows_pad, c_pad), -1e30, np.float32)
    buf[:rows, :c] = flat

    kern = functools.partial(_prob_kernel, focal=bool(focal))
    out = pl.pallas_call(
        kern,
        out_shape=jax.ShapeDtypeStruct((rows_pad, c_pad), jnp.float32),
        grid=(rows_pad // tile_r,),
        in_specs=[pl.BlockSpec((tile_r, c_pad), lambda r: (r, 0))],
        out_specs=pl.BlockSpec((tile_r, c_pad), lambda r: (r, 0)),
        compiler_params=pltpu.CompilerParams(dimension_semantics=("parallel",)),
    )(jnp.asarray(buf))
    return out[:rows, :c]


# ----------------------------------------------------------------------------
# Host-side assignment (sequential / data-dependent; no clean Pallas equivalent)
# ----------------------------------------------------------------------------
def _hungarian(cost):
    """Min-cost assignment, shortest-augmenting-path Hungarian, n <= m, O(n^2 m)."""
    cost = np.asarray(cost, dtype=np.float64)
    n, m = cost.shape
    INF = np.inf
    u = np.zeros(n + 1)
    v = np.zeros(m + 1)
    p = np.zeros(m + 1, dtype=np.int64)       # p[j] = row assigned to column j (1-based)
    way = np.zeros(m + 1, dtype=np.int64)
    for i in range(1, n + 1):
        p[0] = i
        j0 = 0
        minv = np.full(m + 1, INF)
        used = np.zeros(m + 1, dtype=bool)
        while True:
            used[j0] = True
            i0 = p[j0]
            free = ~used[1:]
            cur = cost[i0 - 1, :] - u[i0] - v[1:]
            minv1 = minv[1:]
            way1 = way[1:]
            upd = free & (cur < minv1)
            minv1[upd] = cur[upd]
            way1[upd] = j0
            masked = np.where(free, minv1, INF)
            j1 = int(np.argmin(masked)) + 1
            delta = masked[j1 - 1]
            u[p[used]] += delta
            v[used] -= delta
            minv1[free] -= delta
            j0 = j1
            if p[j0] == 0:
                break
        while True:
            j1 = way[j0]
            p[j0] = p[j1]
            j0 = j1
            if j0 == 0:
                break
    rows = p[1:] - 1
    cols = np.arange(m, dtype=np.int64)
    valid = rows >= 0
    rows, cols = rows[valid], cols[valid]
    order = np.argsort(rows)
    return rows[order].astype(np.int64), cols[order].astype(np.int64)


def _linear_sum_assignment(cost):
    """scipy.optimize.linear_sum_assignment-compatible optimal matching."""
    # TODO(synk): Hungarian algorithm is sequential and data-dependent; solved on
    # host with an O(n^2 m) shortest-augmenting-path implementation (no Pallas form).
    cost = np.asarray(cost, dtype=np.float64)
    n, m = cost.shape
    if n == 0 or m == 0:
        return np.zeros(0, np.int64), np.zeros(0, np.int64)
    if n <= m:
        return _hungarian(cost)
    r_t, c_t = _hungarian(cost.T)
    rows, cols = c_t, r_t
    order = np.argsort(rows)
    return rows[order], cols[order]


# ----------------------------------------------------------------------------
# Matcher (mirrors the PyTorch module's forward semantics)
# ----------------------------------------------------------------------------
class OrderDetectionsMatcherTransformer1Pallas:
    def __init__(self, n_predictions, assignment_predictions, cost_class=1.0,
                 cost_bbox=1.0, cost_giou=1.0, focal_loss=False,
                 focal_alpha=0.25, focal_gamma=2.0):
        assert n_predictions % assignment_predictions == 0
        assert cost_class != 0 or cost_bbox != 0 or cost_giou != 0
        self.cost_class = cost_class
        self.cost_bbox = cost_bbox
        self.cost_giou = cost_giou
        self.focal_loss = focal_loss
        self.focal_alpha = focal_alpha
        self.focal_gamma = focal_gamma
        self.n_predictions = n_predictions
        self.n_assign = assignment_predictions
        self.max_predictions = n_predictions // assignment_predictions
        self.max_cost = -self.cost_giou * 0.1 + self.cost_bbox * 0.6
        self.last_out_prob = None

    def calculate_matching_detections(self, targets):
        det_list = [np.asarray(t['detections'], np.float32) for t in targets]
        box_list = [np.asarray(t['boxes'], np.float32) for t in targets]
        # One kernel launch for every target, one device->host transfer total.
        cost_dev = pallas_pair_cost_batched(det_list, box_list,
                                            self.cost_bbox, self.cost_giou)
        cost_all = np.asarray(cost_dev)
        indices = []
        for i, (d, b) in enumerate(zip(det_list, box_list)):
            nd, nt = d.shape[0], b.shape[0]
            c = cost_all[i, :nd, :nt]
            rows, cols = _linear_sum_assignment(c)
            kept = np.array(
                [(r, cl) for r, cl in zip(rows, cols) if c[r, cl] < self.max_cost]
            ).reshape([-1, 2])
            indices += [(kept[:, 0], kept[:, 1])]
        return indices

    def forward(self, outputs, targets):
        indices_detections2target = self.calculate_matching_detections(targets)
        batch_size, num_queries = outputs['pred_logits'].shape[:2]
        # out_prob is computed (as in the reference forward) but unused downstream.
        self.last_out_prob = pallas_out_prob(outputs['pred_logits'], self.focal_loss)

        indices = []
        num_track_queries = num_queries - self.n_predictions
        for i, target_batch in enumerate(targets):
            indices_det, indices_targets = indices_detections2target[i]
            n_dets = len(indices_det)
            indices_predictions = (num_track_queries
                                   + indices_det % self.max_predictions * self.n_assign)
            indices_predictions2 = (
                indices_predictions[:, None]
                + np.tile(np.arange(self.n_assign)[None], (n_dets, 1))
            ).reshape(-1)
            indices_targets2 = np.tile(indices_targets[:, None], self.n_assign).reshape([-1])
            if 'track_query_match_ids' in target_batch:
                tracklets_predictions = []
                tracklets_targets = []
                for j in range(num_track_queries):
                    if bool(target_batch['track_queries_mask'][j]):
                        track_query_id = int(target_batch['track_query_match_ids'][j])
                        matched = indices_targets2 == track_query_id
                        index_matched = matched.nonzero()
                        if len(index_matched[0]):
                            indices_predictions2[index_matched] = j
                        else:
                            tracklets_targets += [track_query_id]
                            tracklets_predictions += [j]
                indices_predictions2 = np.concatenate(
                    [indices_predictions2, np.array(tracklets_predictions, dtype=np.int32)])
                indices_targets2 = np.concatenate(
                    [indices_targets2, np.array(tracklets_targets, dtype=np.int32)])
            indices += [(indices_predictions2, indices_targets2)]
        return [(np.asarray(i, dtype=np.int64), np.asarray(j, dtype=np.int64))
                for i, j in indices]


# ----------------------------------------------------------------------------
# Demo
# ----------------------------------------------------------------------------
if __name__ == "__main__":
    key = jax.random.PRNGKey(0)
    B = 2
    n_predictions = 8
    n_assign = 2
    num_queries = n_predictions      # no track queries in this example
    num_classes = 5

    k_logits, k_boxes, k_tgt = jax.random.split(key, 3)
    pred_logits = jax.random.normal(k_logits, (B, num_queries, num_classes), jnp.float32)
    pred_boxes = jax.nn.sigmoid(jax.random.normal(k_boxes, (B, num_queries, 4)))
    outputs = {'pred_logits': pred_logits, 'pred_boxes': pred_boxes}

    targets = []
    n_tgt_per_batch = [3, 5]         # ragged targets exercise the padding path
    for b in range(B):
        n_tgt = n_tgt_per_batch[b]
        kb1, kb2, kb3, k_tgt = jax.random.split(k_tgt, 4)
        cxcy = jax.random.uniform(kb1, (n_tgt, 2), minval=0.3, maxval=0.7)
        wh = jax.random.uniform(kb2, (n_tgt, 2), minval=0.1, maxval=0.3)
        boxes = jnp.concatenate([cxcy, wh], axis=-1).astype(jnp.float32)
        noise = 0.01 * jax.random.normal(kb3, (n_tgt, 4), jnp.float32)
        dets_close = boxes + noise
        spurious = jnp.array([[0.9, 0.9, 0.05, 0.05]], jnp.float32)   # unmatched detection
        detections = jnp.concatenate([dets_close, spurious], axis=0)
        labels = jnp.arange(n_tgt, dtype=jnp.int32) % num_classes
        targets.append({'labels': labels, 'boxes': boxes, 'detections': detections})

    matcher = OrderDetectionsMatcherTransformer1Pallas(n_predictions, n_assign)
    result = matcher.forward(outputs, targets)
    jax.block_until_ready(matcher.last_out_prob)

    # --- correctness check of the cost kernel against a numpy reference ---
    def _ref_cost(det, box, wb, wg):
        det = np.asarray(det, np.float64)
        box = np.asarray(box, np.float64)
        l1 = np.abs(det[:, None, :] - box[None, :, :]).sum(-1)

        def xyxy(z):
            return np.stack([z[:, 0] - z[:, 2] / 2, z[:, 1] - z[:, 3] / 2,
                             z[:, 0] + z[:, 2] / 2, z[:, 1] + z[:, 3] / 2], -1)

        d, t = xyxy(det), xyxy(box)
        ad = (d[:, 2] - d[:, 0]) * (d[:, 3] - d[:, 1])
        at = (t[:, 2] - t[:, 0]) * (t[:, 3] - t[:, 1])
        lt = np.maximum(d[:, None, :2], t[None, :, :2])
        rb = np.minimum(d[:, None, 2:], t[None, :, 2:])
        wh = np.clip(rb - lt, 0, None)
        inter = wh[..., 0] * wh[..., 1]
        union = ad[:, None] + at[None, :] - inter
        iou = inter / union
        elt = np.minimum(d[:, None, :2], t[None, :, :2])
        erb = np.maximum(d[:, None, 2:], t[None, :, 2:])
        ewh = erb - elt
        enc = ewh[..., 0] * ewh[..., 1]
        giou = iou - (enc - union) / enc
        return wb * l1 - wg * giou

    det_list = [np.asarray(t['detections'], np.float32) for t in targets]
    box_list = [np.asarray(t['boxes'], np.float32) for t in targets]
    cost_all = np.asarray(pallas_pair_cost_batched(det_list, box_list, 1.0, 1.0))
    for i, (d, bx) in enumerate(zip(det_list, box_list)):
        ref = _ref_cost(d, bx, 1.0, 1.0)
        got = cost_all[i, :d.shape[0], :bx.shape[0]]
        np.testing.assert_allclose(got, ref, rtol=5e-2, atol=5e-2)

    # --- light structural checks of the matcher output ---
    assert len(result) == B
    for (idx_i, idx_j), n_tgt in zip(result, n_tgt_per_batch):
        assert idx_i.dtype == np.int64 and idx_j.dtype == np.int64
        assert idx_i.shape == idx_j.shape
        assert idx_i.shape[0] == n_tgt * n_assign   # each close detection expanded

    print("KERNEL_OK")
</pallas_src>

<mosaic_0001>
module attributes {stable_mosaic.version = 11 : i64} {
  func.func @_pair_cost_kernel(%arg0: i32, %arg1: i32, %arg2: memref<1x8x4xf32, #tpu.memory_space<vmem>>, %arg3: memref<1x4x128xf32, #tpu.memory_space<vmem>>, %arg4: memref<1x8x128xf32, #tpu.memory_space<vmem>>) attributes {dimension_semantics = [#tpu.dimension_semantics<parallel>, #tpu.dimension_semantics<parallel>], iteration_bounds = array<i64: 2, 1>, scalar_prefetch = 0 : i64, scratch_operands = 0 : i64, tpu.core_type = #tpu.core_type<tc>, window_params = [{transform_indices = @transform_0, window_bounds = array<i64: 1, 8, 4>}, {transform_indices = @transform_1, window_bounds = array<i64: 1, 4, 128>}, {transform_indices = @transform_2, window_bounds = array<i64: 1, 8, 128>}]} {
    %c0 = arith.constant 0 : index
    %c0_0 = arith.constant 0 : index
    %c0_1 = arith.constant 0 : index
    %0 = vector.load %arg2[%c0, %c0_0, %c0_1] : memref<1x8x4xf32, #tpu.memory_space<vmem>>, vector<1x8x4xf32>
    %1 = vector.shape_cast %0 : vector<1x8x4xf32> to vector<8x4xf32>
    %c0_2 = arith.constant 0 : index
    %c0_3 = arith.constant 0 : index
    %c0_4 = arith.constant 0 : index
    %2 = vector.load %arg3[%c0_2, %c0_3, %c0_4] : memref<1x4x128xf32, #tpu.memory_space<vmem>>, vector<1x4x128xf32>
    %3 = vector.shape_cast %2 : vector<1x4x128xf32> to vector<4x128xf32>
    %4 = vector.extract_strided_slice %1 {offsets = [0, 0], sizes = [8, 1], strides = [1, 1]} : vector<8x4xf32> to vector<8x1xf32>
    %5 = vector.extract_strided_slice %1 {offsets = [0, 1], sizes = [8, 1], strides = [1, 1]} : vector<8x4xf32> to vector<8x1xf32>
    %6 = vector.extract_strided_slice %1 {offsets = [0, 2], sizes = [8, 1], strides = [1, 1]} : vector<8x4xf32> to vector<8x1xf32>
    %7 = vector.extract_strided_slice %1 {offsets = [0, 3], sizes = [8, 1], strides = [1, 1]} : vector<8x4xf32> to vector<8x1xf32>
    %8 = vector.extract_strided_slice %3 {offsets = [0, 0], sizes = [1, 128], strides = [1, 1]} : vector<4x128xf32> to vector<1x128xf32>
    %9 = vector.extract_strided_slice %3 {offsets = [1, 0], sizes = [1, 128], strides = [1, 1]} : vector<4x128xf32> to vector<1x128xf32>
    %10 = vector.extract_strided_slice %3 {offsets = [2, 0], sizes = [1, 128], strides = [1, 1]} : vector<4x128xf32> to vector<1x128xf32>
    %11 = vector.extract_strided_slice %3 {offsets = [3, 0], sizes = [1, 128], strides = [1, 1]} : vector<4x128xf32> to vector<1x128xf32>
    %12 = vector.broadcast %4 : vector<8x1xf32> to vector<8x128xf32>
    %13 = vector.broadcast %8 : vector<1x128xf32> to vector<8x128xf32>
    %14 = arith.subf %12, %13 : vector<8x128xf32>
    %15 = math.absf %14 : vector<8x128xf32>
    %16 = vector.broadcast %5 : vector<8x1xf32> to vector<8x128xf32>
    %17 = vector.broadcast %9 : vector<1x128xf32> to vector<8x128xf32>
    %18 = arith.subf %16, %17 : vector<8x128xf32>
    %19 = math.absf %18 : vector<8x128xf32>
    %20 = arith.addf %15, %19 : vector<8x128xf32>
    %21 = vector.broadcast %6 : vector<8x1xf32> to vector<8x128xf32>
    %22 = vector.broadcast %10 : vector<1x128xf32> to vector<8x128xf32>
    %23 = arith.subf %21, %22 : vector<8x128xf32>
    %24 = math.absf %23 : vector<8x128xf32>
    %25 = arith.addf %20, %24 : vector<8x128xf32>
    %26 = vector.broadcast %7 : vector<8x1xf32> to vector<8x128xf32>
    %27 = vector.broadcast %11 : vector<1x128xf32> to vector<8x128xf32>
    %28 = arith.subf %26, %27 : vector<8x128xf32>
    %29 = math.absf %28 : vector<8x128xf32>
    %30 = arith.addf %25, %29 : vector<8x128xf32>
    %cst = arith.constant 5.000000e-01 : f32
    %31 = vector.broadcast %cst : f32 to vector<8x1xf32>
    %32 = arith.mulf %31, %6 : vector<8x1xf32>
    %33 = arith.subf %4, %32 : vector<8x1xf32>
    %cst_5 = arith.constant 5.000000e-01 : f32
    %34 = vector.broadcast %cst_5 : f32 to vector<8x1xf32>
    %35 = arith.mulf %34, %6 : vector<8x1xf32>
    %36 = arith.addf %4, %35 : vector<8x1xf32>
    %cst_6 = arith.constant 5.000000e-01 : f32
    %37 = vector.broadcast %cst_6 : f32 to vector<8x1xf32>
    %38 = arith.mulf %37, %7 : vector<8x1xf32>
    %39 = arith.subf %5, %38 : vector<8x1xf32>
    %cst_7 = arith.constant 5.000000e-01 : f32
    %40 = vector.broadcast %cst_7 : f32 to vector<8x1xf32>
    %41 = arith.mulf %40, %7 : vector<8x1xf32>
    %42 = arith.addf %5, %41 : vector<8x1xf32>
    %cst_8 = arith.constant 5.000000e-01 : f32
    %43 = vector.broadcast %cst_8 : f32 to vector<1x128xf32>
    %44 = arith.mulf %43, %10 : vector<1x128xf32>
    %45 = arith.subf %8, %44 : vector<1x128xf32>
    %cst_9 = arith.constant 5.000000e-01 : f32
    %46 = vector.broadcast %cst_9 : f32 to vector<1x128xf32>
    %47 = arith.mulf %46, %10 : vector<1x128xf32>
    %48 = arith.addf %8, %47 : vector<1x128xf32>
    %cst_10 = arith.constant 5.000000e-01 : f32
    %49 = vector.broadcast %cst_10 : f32 to vector<1x128xf32>
    %50 = arith.mulf %49, %11 : vector<1x128xf32>
    %51 = arith.subf %9, %50 : vector<1x128xf32>
    %cst_11 = arith.constant 5.000000e-01 : f32
    %52 = vector.broadcast %cst_11 : f32 to vector<1x128xf32>
    %53 = arith.mulf %52, %11 : vector<1x128xf32>
    %54 = arith.addf %9, %53 : vector<1x128xf32>
    %55 = arith.mulf %6, %7 : vector<8x1xf32>
    %56 = arith.mulf %10, %11 : vector<1x128xf32>
    %57 = vector.broadcast %33 : vector<8x1xf32> to vector<8x128xf32>
    %58 = vector.broadcast %45 : vector<1x128xf32> to vector<8x128xf32>
    %59 = arith.maximumf %57, %58 : vector<8x128xf32>
    %60 = vector.broadcast %39 : vector<8x1xf32> to vector<8x128xf32>
    %61 = vector.broadcast %51 : vector<1x128xf32> to vector<8x128xf32>
    %62 = arith.maximumf %60, %61 : vector<8x128xf32>
    %63 = vector.broadcast %36 : vector<8x1xf32> to vector<8x128xf32>
    %64 = vector.broadcast %48 : vector<1x128xf32> to vector<8x128xf32>
    %65 = arith.minimumf %63, %64 : vector<8x128xf32>
    %66 = vector.broadcast %42 : vector<8x1xf32> to vector<8x128xf32>
    %67 = vector.broadcast %54 : vector<1x128xf32> to vector<8x128xf32>
    %68 = arith.minimumf %66, %67 : vector<8x128xf32>
    %69 = arith.subf %65, %59 : vector<8x128xf32>
    %cst_12 = arith.constant 0.000000e+00 : f32
    %70 = vector.broadcast %cst_12 : f32 to vector<8x128xf32>
    %71 = arith.maximumf %69, %70 : vector<8x128xf32>
    %72 = arith.subf %68, %62 : vector<8x128xf32>
    %cst_13 = arith.constant 0.000000e+00 : f32
    %73 = vector.broadcast %cst_13 : f32 to vector<8x128xf32>
    %74 = arith.maximumf %72, %73 : vector<8x128xf32>
    %75 = arith.mulf %71, %74 : vector<8x128xf32>
    %76 = vector.broadcast %55 : vector<8x1xf32> to vector<8x128xf32>
    %77 = vector.broadcast %56 : vector<1x128xf32> to vector<8x128xf32>
    %78 = arith.addf %76, %77 : vector<8x128xf32>
    %79 = arith.subf %78, %75 : vector<8x128xf32>
    %80 = tpu.reciprocal %79 {approx = true} : vector<8x128xf32> -> vector<8x128xf32>
    %81 = arith.mulf %75, %80 : vector<8x128xf32>
    %82 = vector.broadcast %36 : vector<8x1xf32> to vector<8x128xf32>
    %83 = vector.broadcast %48 : vector<1x128xf32> to vector<8x128xf32>
    %84 = arith.maximumf %82, %83 : vector<8x128xf32>
    %85 = vector.broadcast %33 : vector<8x1xf32> to vector<8x128xf32>
    %86 = vector.broadcast %45 : vector<1x128xf32> to vector<8x128xf32>
    %87 = arith.minimumf %85, %86 : vector<8x128xf32>
    %88 = arith.subf %84, %87 : vector<8x128xf32>
    %89 = vector.broadcast %42 : vector<8x1xf32> to vector<8x128xf32>
    %90 = vector.broadcast %54 : vector<1x128xf32> to vector<8x128xf32>
    %91 = arith.maximumf %89, %90 : vector<8x128xf32>
    %92 = vector.broadcast %39 : vector<8x1xf32> to vector<8x128xf32>
    %93 = vector.broadcast %51 : vector<1x128xf32> to vector<8x128xf32>
    %94 = arith.minimumf %92, %93 : vector<8x128xf32>
    %95 = arith.subf %91, %94 : vector<8x128xf32>
    %96 = arith.mulf %88, %95 : vector<8x128xf32>
    %97 = arith.subf %96, %79 : vector<8x128xf32>
    %98 = tpu.reciprocal %96 {approx = true} : vector<8x128xf32> -> vector<8x128xf32>
    %99 = arith.mulf %97, %98 : vector<8x128xf32>
    %100 = arith.subf %81, %99 : vector<8x128xf32>
    %cst_14 = arith.constant 1.000000e+00 : f32
    %101 = vector.broadcast %cst_14 : f32 to vector<8x128xf32>
    %102 = arith.mulf %101, %30 : vector<8x128xf32>
    %cst_15 = arith.constant 1.000000e+00 : f32
    %103 = vector.broadcast %cst_15 : f32 to vector<8x128xf32>
    %104 = arith.mulf %103, %100 : vector<8x128xf32>
    %105 = arith.subf %102, %104 : vector<8x128xf32>
    %c0_16 = arith.constant 0 : index
    %c0_17 = arith.constant 0 : index
    %c0_18 = arith.constant 0 : index
    %106 = vector.load %arg4[%c0_16, %c0_17, %c0_18] : memref<1x8x128xf32, #tpu.memory_space<vmem>>, vector<1x8x128xf32>
    %107 = vector.shape_cast %106 : vector<1x8x128xf32> to vector<8x128xf32>
    %108 = vector.shape_cast %105 : vector<8x128xf32> to vector<1x8x128xf32>
    tpu.vector_store %arg4[%c0_16, %c0_17, %c0_18], %108 {strides = array<i32>} : memref<1x8x128xf32, #tpu.memory_space<vmem>>, vector<1x8x128xf32>,
    return
  }
  func.func @transform_0(%arg0: i32, %arg1: i32) -> (i32, i32, i32) {
    %c0_i32 = arith.constant 0 : i32
    %c0_i32_0 = arith.constant 0 : i32
    return %arg0, %arg1, %c0_i32 : i32, i32, i32
  }
  func.func @transform_1(%arg0: i32, %arg1: i32) -> (i32, i32, i32) {
    %c0_i32 = arith.constant 0 : i32
    %c0_i32_0 = arith.constant 0 : i32
    %c0_i32_1 = arith.constant 0 : i32
    return %arg0, %c0_i32, %c0_i32_0 : i32, i32, i32
  }
  func.func @transform_2(%arg0: i32, %arg1: i32) -> (i32, i32, i32) {
    %c0_i32 = arith.constant 0 : i32
    %c0_i32_0 = arith.constant 0 : i32
    return %arg0, %arg1, %c0_i32 : i32, i32, i32
  }
}

</mosaic_0001>

<llo_original>
// kernel: tpu_custom_call.1
$region0: #{tpu_custom_call.1}
  #allocation0 [shape = 'u32[]', space=smem, size = 0x4, offset = 0x4, fixed_abs, tag = 'smem constant byte address 0x4 - core index']
  #allocation1 [shape = 'u32[144,128]{1,0:T(1,128)}', space=vmem, size = 0x12000, scoped, tag = 'internal scratch']
  %s0 = inlined_call_operand.vmem [shape: f32[2,8,4], index: 0, kind: input, shape index: {}]
  %s1 = inlined_call_operand.vmem [shape: f32[2,4,128], index: 1, kind: input, shape index: {}]
  %s2 = inlined_call_operand.hbm [shape: f32[2,8,128], index: 2, kind: output, shape index: {}]
  %s3 = sld [smem:[#allocation0]]
  $region41: #{tpu_custom_call.1} parent=0
    _
  %s5 = ssub.s32 1, %s3
  %s6 = scalar_select 0, %s5, %s3
  $region1: #{tpu_custom_call.1} parent=0
    #allocation2 [shape = 'u8[8192]{0}', space=vmem, size = 0x2000, scoped, tag = 'output window, operand 0']
    #allocation3 [shape = 's32[2]{0}', space=sflag, size = 0x8, scoped, tag = 'scoped memory for tpu_custom_call.1']
    %7 = vsyncpa [#allocation3], 0
    %s8 = scalar_lea.sflag [#allocation3], 1
    %9 = vsyncpa %s8, 0
    loop: start=0, step=1, limit=4
    $region2: #{tpu_custom_call.1} parent=1 // loop_pre_header
      _
    $region3: #{tpu_custom_call.1} parent=1 // loop_header
      %s11 = sphi 0, %s15
      %p12 = scmp.ge.s32.totalorder %s11, 4
      %s18 = sphi 0, %s30
      %s19 = sphi 0, %s26
      %s20 = sphi 0, %s18
      %s21 = sphi 0, %s19
      %s22 = sphi 0, %s20
      %s23 = sphi 0, %s21
      %s35 = sphi 0, %s37
      %s38 = sphi 0, %s35
      %s39 = sphi 0, %s38
      %s55 = sphi 0, %s39
      %s61 = sphi 0, %s63
      %s64 = sphi 0, %s61
      %s65 = sphi 0, %s64
      %s81 = sphi 0, %s65
      %s89 = sphi 0, %s91
      %s92 = sphi 0, %s89
      %s93 = sphi 0, %s92
      %s109 = sphi 0, %s93
    $region4: #{tpu_custom_call.1} parent=1 // loop_header_branch
      %14 = sbr.rel (%p12) target = $region8
    $region5: #{tpu_custom_call.1} parent=1 // loop_body
      %s16 = ssub.s32 %s11, 1
      %s17 = ssub.s32 %s11, 2
      %s24 = sadd.s32 1, %s19
      %p25 = scmp.ge.s32.totalorder %s24, 1
      %s26 = scalar_select %p25, 0, %s24
      %s27 = sadd.s32 1, %s18
      %s28 = scalar_select %p25, %s27, %s18
      %p29 = scmp.ge.s32.totalorder %s28, 2
      %s30 = scalar_select %p29, 0, %s28
      %s31 = ssub.s32 %s18, %s30
      %s32 = ssub.s32 %s19, %s26
      %s33 = sor.u32 %s31, %s32
      %p34 = scmp.eq.s32.totalorder %s33, 0
      %s36 = sadd.s32 %s35, 1
      %s37 = scalar_select %p34, %s35, %s36
      %p40 = pneg %p34
      %p41 = scmp.eq.s32.totalorder %s11, 1
      %p42 = por %p40, %p41
      %p43 = scmp.ne.s32.totalorder %s35, %s38
      %p44 = scmp.eq.s32.totalorder %s11, 0
      %p45 = por %p43, %p44
      %p46 = scmp.ne.s32.totalorder %s35, %s38
      %p47 = scmp.eq.s32.totalorder %s16, 1
      %p48 = por %p46, %p47
      %p49 = scmp.ne.s32.totalorder %s38, %s39
      %p50 = scmp.eq.s32.totalorder %s16, 0
      %p51 = por %p49, %p50
      %p52 = scmp.ne.s32.totalorder %s38, %s39
      %p53 = scmp.eq.s32.totalorder %s17, 1
      %p54 = por %p52, %p53
      %p56 = scmp.ne.s32.totalorder %s39, %s55
      %p57 = scmp.eq.s32.totalorder %s17, 0
      %p58 = por %p56, %p57
      %s59 = ssub.s32 %s18, %s30
      %p60 = scmp.eq.s32.totalorder %s59, 0
      %s62 = sadd.s32 %s61, 1
      %s63 = scalar_select %p60, %s61, %s62
      %p66 = pneg %p60
      %p67 = scmp.eq.s32.totalorder %s11, 1
      %p68 = por %p66, %p67
      %p69 = scmp.ne.s32.totalorder %s61, %s64
      %p70 = scmp.eq.s32.totalorder %s11, 0
      %p71 = por %p69, %p70
      %p72 = scmp.ne.s32.totalorder %s61, %s64
      %p73 = scmp.eq.s32.totalorder %s16, 1
      %p74 = por %p72, %p73
      %p75 = scmp.ne.s32.totalorder %s64, %s65
      %p76 = scmp.eq.s32.totalorder %s16, 0
      %p77 = por %p75, %p76
      %p78 = scmp.ne.s32.totalorder %s64, %s65
      %p79 = scmp.eq.s32.totalorder %s17, 1
      %p80 = por %p78, %p79
      %p82 = scmp.ne.s32.totalorder %s65, %s81
      %p83 = scmp.eq.s32.totalorder %s17, 0
      %p84 = por %p82, %p83
      %s85 = ssub.s32 %s18, %s30
      %s86 = ssub.s32 %s19, %s26
      %s87 = sor.u32 %s85, %s86
      %p88 = scmp.eq.s32.totalorder %s87, 0
      %s90 = sadd.s32 %s89, 1
      %s91 = scalar_select %p88, %s89, %s90
      %p94 = pneg %p88
      %p95 = scmp.eq.s32.totalorder %s11, 1
      %p96 = por %p94, %p95
      %p97 = scmp.ne.s32.totalorder %s89, %s92
      %p98 = scmp.eq.s32.totalorder %s11, 0
      %p99 = por %p97, %p98
      %p100 = scmp.ne.s32.totalorder %s89, %s92
      %p101 = scmp.eq.s32.totalorder %s16, 1
      %p102 = por %p100, %p101
      %p103 = scmp.ne.s32.totalorder %s92, %s93
      %p104 = scmp.eq.s32.totalorder %s16, 0
      %p105 = por %p103, %p104
      %p106 = scmp.ne.s32.totalorder %s92, %s93
      %p107 = scmp.eq.s32.totalorder %s17, 1
      %p108 = por %p106, %p107
      %p110 = scmp.ne.s32.totalorder %s93, %s109
      %p111 = scmp.eq.s32.totalorder %s17, 0
      %p112 = por %p110, %p111
      %p113 = scmp.le.s32.totalorder 1, %s11
      %p114 = scmp.lt.s32.totalorder %s11, 3
      %p115 = pnand %p113, %p114
      %p116 = pneg %p115
      // Predicated region
      $region9: #{tpu_custom_call.1} parent=5 // pred_check
        _
      $region10: #{tpu_custom_call.1} parent=5 // pred_check_branch
        %118 = sbr.rel (%p115) target = $region12
      $region11: #{tpu_custom_call.1} parent=5 // pred_region
        %s119 = ssub.s32 %s11, 1
      $region12: #{tpu_custom_call.1} parent=5 // pred_fallthru
        _
      %p120 = scmp.lt.s32.totalorder %s11, 2
      // Predicated region
      $region13: #{tpu_custom_call.1} parent=5 // pred_check
        %p121 = pneg %p120
      $region14: #{tpu_custom_call.1} parent=5 // pred_check_branch
        %123 = sbr.rel (%p121) target = $region16
      $region15: #{tpu_custom_call.1} parent=5 // pred_region
        // Predicated region
        $region17: #{tpu_custom_call.1} parent=15 // pred_check
          %p124 = pneg %p45
        $region18: #{tpu_custom_call.1} parent=15 // pred_check_branch
          %126 = sbr.rel (%p124) target = $region20
        $region19: #{tpu_custom_call.1} parent=15 // pred_region
          %p127 = scmp.lt.s32.totalorder %s18, 1
          %s128 = scalar_select %p127, %s18, 1
          %p129 = scmp.lt.s32.totalorder %s19, 0
          %s130 = scalar_select %p129, %s19, 0
          %s131 = sadd.s32 %s130, %s128
          %s132 = smul.addr %s131, 8
          %s133 = scalar_lea.vmem %s0, %s132
        $region20: #{tpu_custom_call.1} parent=15 // pred_fallthru
          _
        // Predicated region
        $region21: #{tpu_custom_call.1} parent=15 // pred_check
          %p134 = pneg %p71
        $region22: #{tpu_custom_call.1} parent=15 // pred_check_branch
          %136 = sbr.rel (%p134) target = $region24
        $region23: #{tpu_custom_call.1} parent=15 // pred_region
          %p137 = scmp.lt.s32.totalorder %s18, 1
          %s138 = scalar_select %p137, %s18, 1
          %s139 = smul.addr %s138, 4
          %s140 = scalar_lea.vmem %s1, %s139
        $region24: #{tpu_custom_call.1} parent=15 // pred_fallthru
          _
      $region16: #{tpu_custom_call.1} parent=5 // pred_fallthru
        _
      %p141 = scmp.le.s32.totalorder 1, %s11
      %p142 = scmp.lt.s32.totalorder %s11, 3
      %p143 = pnand %p141, %p142
      %p144 = pneg %p143
      // Predicated region
      $region25: #{tpu_custom_call.1} parent=5 // pred_check
        _
      $region26: #{tpu_custom_call.1} parent=5 // pred_check_branch
        %146 = sbr.rel (%p143) target = $region28
      $region27: #{tpu_custom_call.1} parent=5 // pred_region
        %s147 = ssub.s32 %s11, 1
        %p148 = scmp.lt.s32.totalorder %s20, 1
        %s149 = scalar_select %p148, %s20, 1
        %p150 = scmp.lt.s32.totalorder %s21, 0
        %s151 = scalar_select %p150, %s21, 0
        %s152 = sadd.s32 %s151, %s149
        %s153 = smul.addr %s152, 8
        %s154 = scalar_lea.vmem %s0, %s153
        %p155 = pneg %p51
        %p156 = pneg %p48
        %p157 = scmp.lt.s32.totalorder %s20, 1
        %s158 = scalar_select %p157, %s20, 1
        %s159 = smul.addr %s158, 4
        %s160 = scalar_lea.vmem %s1, %s159
        %p161 = pneg %p77
        %p162 = pneg %p74
        %p163 = pneg %p105
        %p164 = pneg %p102
        %s165 = sand.u32 %s92, 1
        %s166 = scalar_lea.sflag [#allocation3], %s165
        %s167 = sand.u32 %s92, 1
        %s168 = smul.addr %s167, 8
        %s169 = scalar_lea.vmem [#allocation2], %s168
        %p170 = scmp.lt.s32.totalorder %s20, 1
        %s171 = scalar_select %p170, %s20, 1
        %p172 = scmp.lt.s32.totalorder %s21, 0
        %s173 = scalar_select %p172, %s21, 0
        %s174 = sadd.s32 %s173, %s171
        %s175 = smul.addr %s174, 8
        %s176 = scalar_lea.vmem %s0, %s175
        %p177 = scmp.lt.s32.totalorder %s20, 1
        %s178 = scalar_select %p177, %s20, 1
        %s179 = smul.addr %s178, 4
        %s180 = scalar_lea.vmem %s1, %s179
        %v181 = vld [vmem:[%s176] sm:$0xff]
        %v182 = vld [vmem:[%s180] sm:$0xf]
        %184 = vset.pattern.permute.xlu0 0
        %185 = vperm.xlu0 %184, %v181
        %v186 = vpop.permute.xlu0 %185
        %v188 = vlaneseq
        %v189 = vshrl.u32 %v188, 7
        %v190 = vsub.s32 0, %v189
        %v191 = vrot.slane %v182, %v190
        %v192 = vsub.f32 %v186, %v191
        %v193 = vand.u32 2147483647, %v192
        %194 = vset.pattern.permute.xlu0 1
        %195 = vperm.xlu0 %194, %v181
        %v196 = vpop.permute.xlu0 %195
        %v198 = vlaneseq
        %v199 = vshrl.u32 %v198, 7
        %v200 = vsub.s32 1, %v199
        %v201 = vrot.slane %v182, %v200
        %v202 = vsub.f32 %v196, %v201
        %v203 = vand.u32 2147483647, %v202
        %v204 = vadd.f32 %v193, %v203
        %205 = vset.pattern.permute.xlu0 2
        %206 = vperm.xlu0 %205, %v181
        %v207 = vpop.permute.xlu0 %206
        %v209 = vlaneseq
        %v210 = vshrl.u32 %v209, 7
        %v211 = vsub.s32 2, %v210
        %v212 = vrot.slane %v182, %v211
        %v213 = vsub.f32 %v207, %v212
        %v214 = vand.u32 2147483647, %v213
        %v215 = vadd.f32 %v204, %v214
        %216 = vset.pattern.permute.xlu0 3
        %217 = vperm.xlu0 %216, %v181
        %v218 = vpop.permute.xlu0 %217
        %v220 = vlaneseq
        %v221 = vshrl.u32 %v220, 7
        %v222 = vsub.s32 3, %v221
        %v223 = vrot.slane %v182, %v222
        %v224 = vsub.f32 %v218, %v223
        %v225 = vand.u32 2147483647, %v224
        %v226 = vadd.f32 %v215, %v225
        %v227 = vmul.f32 %v181, 0.5
        %229 = vrot.lane.b32.xlu0 %v227, 126
        %v230 = vpop.permute.xlu0 %229
        %v232 = vsub.f32 %v181, %v230
        %v233 = vadd.f32 %v181, %v230
        %v234 = vmul.f32 %v182, 0.5
        %v236 = vrot.slane %v234, 2
        %v238 = vsub.f32 %v182, %v236
        %v239 = vadd.f32 %v182, %v236
        %240 = vrot.lane.b32.xlu0 %v181, 127
        %v241 = vpop.permute.xlu0 %240
        %v243 = vmul.f32 %v181, %v241
        %v245 = vrot.slane %v182, 1
        %v247 = vmul.f32 %v182, %v245
        %249 = vset.pattern.permute.xlu0 0
        %250 = vperm.xlu0 %249, %v232
        %v251 = vpop.permute.xlu0 %250
        %v253 = vlaneseq
        %v254 = vshrl.u32 %v253, 7
        %v255 = vsub.s32 0, %v254
        %v256 = vrot.slane %v238, %v255
        %v257 = vmax.f32 %v251, %v256
        %258 = vset.pattern.permute.xlu0 1
        %259 = vperm.xlu0 %258, %v232
        %v260 = vpop.permute.xlu0 %259
        %v262 = vlaneseq
        %v263 = vshrl.u32 %v262, 7
        %v264 = vsub.s32 1, %v263
        %v265 = vrot.slane %v238, %v264
        %v266 = vmax.f32 %v260, %v265
        %268 = vset.pattern.permute.xlu0 0
        %269 = vperm.xlu0 %268, %v233
        %v270 = vpop.permute.xlu0 %269
        %v272 = vlaneseq
        %v273 = vshrl.u32 %v272, 7
        %v274 = vsub.s32 0, %v273
        %v275 = vrot.slane %v239, %v274
        %v276 = vmin.f32 %v270, %v275
        %277 = vset.pattern.permute.xlu0 1
        %278 = vperm.xlu0 %277, %v233
        %v279 = vpop.permute.xlu0 %278
        %v281 = vlaneseq
        %v282 = vshrl.u32 %v281, 7
        %v283 = vsub.s32 1, %v282
        %v284 = vrot.slane %v239, %v283
        %v285 = vmin.f32 %v279, %v284
        %v286 = vsub.f32 %v276, %v257
        %v287 = vmax.f32 %v286, 0.0
        %v288 = vsub.f32 %v285, %v266
        %v289 = vmax.f32 %v288, 0.0
        %v290 = vmul.f32 %v287, %v289
        %292 = vset.pattern.permute.xlu0 2
        %293 = vperm.xlu0 %292, %v243
        %v294 = vpop.permute.xlu0 %293
        %v296 = vlaneseq
        %v297 = vshrl.u32 %v296, 7
        %v298 = vsub.s32 2, %v297
        %v299 = vrot.slane %v247, %v298
        %v300 = vadd.f32 %v294, %v299
        %v301 = vsub.f32 %v300, %v290
        %v302 = vrcp.pop %v301
        %v303 = vmul.f32 %v290, %v302
        %v304 = vmax.f32 %v270, %v275
        %v305 = vmin.f32 %v251, %v256
        %v306 = vsub.f32 %v304, %v305
        %v307 = vmax.f32 %v279, %v284
        %v308 = vmin.f32 %v260, %v265
        %v309 = vsub.f32 %v307, %v308
        %v310 = vmul.f32 %v306, %v309
        %v311 = vsub.f32 %v310, %v301
        %v312 = vrcp.pop %v310
        %v313 = vmul.f32 %v311, %v312
        %v314 = vsub.f32 %v303, %v313
        %v315 = vsub.f32 %v226, %v314
        %316 = vst [vmem:[%s169] sm:$0xff] %v315
        %s317 = sand.u32 %s92, 1
        %s318 = scalar_lea.sflag [#allocation3], %s317
        %s319 = sand.u32 %s92, 1
        %s320 = smul.addr %s319, 8
        %s321 = scalar_lea.vmem [#allocation2], %s320
        // Predicated region
        $region29: #{tpu_custom_call.1} parent=27 // pred_check
          %p322 = pneg %p102
        $region30: #{tpu_custom_call.1} parent=27 // pred_check_branch
          %324 = sbr.rel (%p322) target = $region32
        $region31: #{tpu_custom_call.1} parent=27 // pred_region
          %s326 = ssub.s32 128, 128
          %327 = vsyncadd %s318, %s326
          %s328 = sadd.s32 %s21, %s20
          %s329 = smul.addr %s328, 128
          %s330 = scalar_lea.hbm %s2, %s329
          %s332 = sshll.u32 %s321, 4
          %s333 = int_to_ptr.vmem [resolvable:$true] %s332
          %335 = dma.vmem_to_hbm [thread:$0]  %s333, 128, %s330, %s318
        $region32: #{tpu_custom_call.1} parent=27 // pred_fallthru
          _
      $region28: #{tpu_custom_call.1} parent=5 // pred_fallthru
        _
      %p336 = scmp.le.s32.totalorder 2, %s11
      // Predicated region
      $region33: #{tpu_custom_call.1} parent=5 // pred_check
        %p337 = pneg %p336
      $region34: #{tpu_custom_call.1} parent=5 // pred_check_branch
        %339 = sbr.rel (%p337) target = $region36
      $region35: #{tpu_custom_call.1} parent=5 // pred_region
        %s340 = ssub.s32 %s11, 2
        // Predicated region
        $region37: #{tpu_custom_call.1} parent=35 // pred_check
          %p341 = pneg %p108
        $region38: #{tpu_custom_call.1} parent=35 // pred_check_branch
          %343 = sbr.rel (%p341) target = $region40
        $region39: #{tpu_custom_call.1} parent=35 // pred_region
          %s344 = sand.u32 %s93, 1
          %s345 = scalar_lea.sflag [#allocation3], %s344
          %s346 = sand.u32 %s93, 1
          %s347 = smul.addr %s346, 8
          %s348 = scalar_lea.vmem [#allocation2], %s347
          %349 = dma.done %s345, 128
        $region40: #{tpu_custom_call.1} parent=35 // pred_fallthru
          _
      $region36: #{tpu_custom_call.1} parent=5 // pred_fallthru
        _
    $region6: #{tpu_custom_call.1} parent=1 // loop_footer
      %s15 = sadd.s32 1, %s11
    $region7: #{tpu_custom_call.1} parent=1 // loop_footer_branch
      %10 = sbr.rel target = $region3
    $region8: #{tpu_custom_call.1} parent=1 // loop_exit
      _
    %350 = vsyncpa [#allocation3], 1
    %s351 = scalar_lea.sflag [#allocation3], 1
    %352 = vsyncpa %s351, 1

</llo_original>
